<compile_context>
chip_gen: v6e
topology: v6e:2x2x1
jax: 0.10.0
libtpu: 0.0.40
codegen_flags: <defaults>
</compile_context>

<pallas_src>
import jax
import jax.numpy as jnp
from jax.experimental import pallas as pl
from jax.experimental.pallas import tpu as pltpu


def _linear_kernel(x_ref, wt_ref, b_ref, o_ref):
    # x_ref : (tm, K)   activation row tile
    # wt_ref: (K, N)    weight, pre-transposed to (in_features, out_features), VMEM-resident
    # b_ref : (1, N)    bias (f32, broadcast over rows)
    # o_ref : (tm, N)
    acc = jnp.dot(x_ref[...], wt_ref[...], preferred_element_type=jnp.float32)
    o_ref[...] = (acc + b_ref[...]).astype(o_ref.dtype)


def _round_up(x: int, n: int) -> int:
    return ((x + n - 1) // n) * n


def prepare_linear_params(weight: jax.Array, bias: jax.Array):
    """One-time conversion of PyTorch nn.Linear parameters.

    Do this at parameter init / checkpoint-load time, NOT per forward call:
      weight: (out_features, in_features) -> (in_features, out_features)
    """
    return jnp.transpose(weight), bias


def simple_linear_model(c: jax.Array, weight_t: jax.Array, bias: jax.Array) -> jax.Array:
    """Pallas implementation of SimpleLinearModel.forward().

    c:        [batch, style_dim, feature_dim]   (style_dim=18, feature_dim=512 per spec)
    weight_t: [in_features, out_features]       (pre-transposed once, see prepare_linear_params)
    bias:     [out_features]
    returns   [batch, style_dim, out_features]
    """
    batch, style_dim, feat_in = c.shape
    k, n = weight_t.shape
    assert k == feat_in, "weight / input feature mismatch"

    m = batch * style_dim

    # Fixed-cap row tile + cdiv grid; Pallas masks the ragged last block.
    tm = min(1024, _round_up(m, 8))
    grid_m = pl.cdiv(m, tm)

    x2 = c.reshape(m, feat_in)                  # flatten (batch, style) -> rows
    b2 = bias.astype(jnp.float32).reshape(1, n)

    x_bytes = m * k * jnp.dtype(c.dtype).itemsize
    w_bytes = k * n * jnp.dtype(weight_t.dtype).itemsize
    b_bytes = n * 4
    o_bytes = m * n * jnp.dtype(c.dtype).itemsize
    cost = pl.CostEstimate(
        flops=2 * m * k * n,
        transcendentals=0,
        bytes_accessed=x_bytes + w_bytes + b_bytes + o_bytes,
    )

    # Only shard across v7x's 2 TensorCores when M is large enough to amortize the
    # duplicated resident-weight DMA; harmless no-op on single-TC v5e/v6e.
    semantics = ("parallel",) if (grid_m >= 2 and m >= 1024) else ("arbitrary",)

    out2 = pl.pallas_call(
        _linear_kernel,
        out_shape=jax.ShapeDtypeStruct((m, n), c.dtype),
        grid=(grid_m,),
        in_specs=[
            # activation row tile, double-buffered by default
            pl.BlockSpec((tm, feat_in), lambda i: (i, 0)),
            # full weight, grid-invariant -> single buffer, loaded once, stays resident
            pl.BlockSpec((feat_in, n), lambda i: (0, 0), pipeline_mode=pl.Buffered(1)),
            # bias, grid-invariant, resident
            pl.BlockSpec((1, n), lambda i: (0, 0), pipeline_mode=pl.Buffered(1)),
        ],
        out_specs=pl.BlockSpec((tm, n), lambda i: (i, 0)),
        compiler_params=pltpu.CompilerParams(dimension_semantics=semantics),
        cost_estimate=cost,
    )(x2, weight_t, b2)

    return out2.reshape(batch, style_dim, n)


if __name__ == "__main__":
    # Shapes fixed by the module's forward assert: style_dim=18, feature_dim=512.
    batch, style_dim, feat = 2, 18, 512

    key = jax.random.PRNGKey(0)
    k_c, k_w, k_b = jax.random.split(key, 3)

    c = jax.random.normal(k_c, (batch, style_dim, feat), dtype=jnp.float32)
    # nn.Linear default init scale ~ 1/sqrt(fan_in); weight in PyTorch (out, in) layout.
    bound = 1.0 / (feat ** 0.5)
    weight = jax.random.uniform(k_w, (feat, feat), jnp.float32, -bound, bound)
    bias = jax.random.uniform(k_b, (feat,), jnp.float32, -bound, bound)

    # One-time parameter prep (outside the per-call hot path).
    weight_t, bias_p = prepare_linear_params(weight, bias)

    out = simple_linear_model(c, weight_t, bias_p)
    out = jax.block_until_ready(out)

    # Reference check (plain JAX): s = c @ W^T + b
    ref = jnp.einsum("bsf,of->bso", c, weight) + bias
    assert out.shape == (batch, style_dim, feat)
    assert jnp.allclose(out, ref, atol=1e-4, rtol=1e-4), float(jnp.max(jnp.abs(out - ref)))

    print("KERNEL_OK")
</pallas_src>

<mosaic_0001>
module attributes {stable_mosaic.version = 11 : i64} {
  func.func @_linear_kernel(%arg0: i32, %arg1: memref<40x512xf32, #tpu.memory_space<vmem>>, %arg2: memref<512x512xf32, #tpu.memory_space<vmem>>, %arg3: memref<1x512xf32, #tpu.memory_space<vmem>>, %arg4: memref<40x512xf32, #tpu.memory_space<vmem>>) attributes {dimension_semantics = [#tpu.dimension_semantics<arbitrary>], iteration_bounds = array<i64: 1>, scalar_prefetch = 0 : i64, scratch_operands = 0 : i64, tpu.core_type = #tpu.core_type<tc>, window_params = [{transform_indices = @transform_0, window_bounds = array<i64: 40, 512>}, {pipeline_mode = #tpu.pipeline_mode<synchronous>, transform_indices = @transform_1, window_bounds = array<i64: 512, 512>}, {pipeline_mode = #tpu.pipeline_mode<synchronous>, transform_indices = @transform_2, window_bounds = array<i64: 1, 512>}, {transform_indices = @transform_3, window_bounds = array<i64: 40, 512>}]} {
    %c0 = arith.constant 0 : index
    %c0_0 = arith.constant 0 : index
    %0 = vector.load %arg1[%c0, %c0_0] : memref<40x512xf32, #tpu.memory_space<vmem>>, vector<40x512xf32>
    %c0_1 = arith.constant 0 : index
    %c0_2 = arith.constant 0 : index
    %1 = vector.load %arg2[%c0_1, %c0_2] : memref<512x512xf32, #tpu.memory_space<vmem>>, vector<512x512xf32>
    %cst = arith.constant dense<0.000000e+00> : vector<40x512xf32>
    %2 = tpu.matmul %0, %1, %cst {dimension_numbers = #tpu.dot_dimension_numbers<[1], [0], [0], [1], [0, 0, 1, 1], [], []>} : vector<40x512xf32>, vector<512x512xf32>, vector<40x512xf32> -> vector<40x512xf32>
    %c0_3 = arith.constant 0 : index
    %c0_4 = arith.constant 0 : index
    %3 = vector.load %arg3[%c0_3, %c0_4] : memref<1x512xf32, #tpu.memory_space<vmem>>, vector<1x512xf32>
    %4 = vector.broadcast %3 : vector<1x512xf32> to vector<40x512xf32>
    %5 = arith.addf %2, %4 : vector<40x512xf32>
    %c0_5 = arith.constant 0 : index
    %c0_6 = arith.constant 0 : index
    %6 = vector.load %arg4[%c0_5, %c0_6] : memref<40x512xf32, #tpu.memory_space<vmem>>, vector<40x512xf32>
    tpu.vector_store %arg4[%c0_5, %c0_6], %5 {strides = array<i32>} : memref<40x512xf32, #tpu.memory_space<vmem>>, vector<40x512xf32>,
    return
  }
  func.func @transform_0(%arg0: i32) -> (i32, i32) {
    %c0_i32 = arith.constant 0 : i32
    %c0_i32_0 = arith.constant 0 : i32
    return %arg0, %c0_i32 : i32, i32
  }
  func.func @transform_1(%arg0: i32) -> (i32, i32) {
    %c0_i32 = arith.constant 0 : i32
    %c0_i32_0 = arith.constant 0 : i32
    %c0_i32_1 = arith.constant 0 : i32
    return %c0_i32, %c0_i32_0 : i32, i32
  }
  func.func @transform_2(%arg0: i32) -> (i32, i32) {
    %c0_i32 = arith.constant 0 : i32
    %c0_i32_0 = arith.constant 0 : i32
    %c0_i32_1 = arith.constant 0 : i32
    return %c0_i32, %c0_i32_0 : i32, i32
  }
  func.func @transform_3(%arg0: i32) -> (i32, i32) {
    %c0_i32 = arith.constant 0 : i32
    %c0_i32_0 = arith.constant 0 : i32
    return %arg0, %c0_i32 : i32, i32
  }
}

</mosaic_0001>

<llo_original>
// kernel: tpu_custom_call.1
$region0: #{tpu_custom_call.1}
  #allocation0 [shape = 'u32[]', space=smem, size = 0x4, offset = 0x4, fixed_abs, tag = 'smem constant byte address 0x4 - core index']
  #allocation1 [shape = 'u32[144,128]{1,0:T(1,128)}', space=vmem, size = 0x12000, scoped, tag = 'internal scratch']
  %s0 = inlined_call_operand.hbm [shape: f32[36,512], index: 0, kind: input, shape index: {}]
  %s1 = inlined_call_operand.hbm [shape: f32[512,512], index: 1, kind: input, shape index: {}]
  %s2 = inlined_call_operand.hbm [shape: f32[1,512], index: 2, kind: input, shape index: {}]
  %s3 = inlined_call_operand.hbm [shape: f32[36,512], index: 3, kind: output, shape index: {}]
  %s4 = sld [smem:[#allocation0]]
  $region34: #{tpu_custom_call.1} parent=0
    _
  %s6 = ssub.s32 1, %s4
  %s7 = scalar_select 0, %s6, %s4
  $region1: #{tpu_custom_call.1} parent=0
    #allocation2 [shape = 'u8[81920]{0}', space=vmem, size = 0x14000, scoped, tag = 'input window, operand 0, single buffered']
    #allocation3 [shape = 's32[1]{0}', space=sflag, size = 0x4, scoped, tag = 'scoped memory for tpu_custom_call.1']
    #allocation4 [shape = 's32[1]{0}', space=sflag, size = 0x4, scoped, tag = 'scoped memory for tpu_custom_call.1']
    #allocation5 [shape = 'u8[1048576]{0}', space=vmem, size = 0x100000, scoped, tag = 'input window, operand 1, single buffered']
    #allocation6 [shape = 's32[1]{0}', space=sflag, size = 0x4, scoped, tag = 'scoped memory for tpu_custom_call.1']
    #allocation7 [shape = 'u8[2048]{0}', space=vmem, size = 0x800, scoped, tag = 'input window, operand 2, single buffered']
    #allocation8 [shape = 'u8[81920]{0}', space=vmem, size = 0x14000, scoped, tag = 'output window, operand 0, single buffered']
    %8 = vsyncpa [#allocation3], 0
    %9 = vsyncpa [#allocation6], 0
    %10 = vsyncpa [#allocation4], 0
    // Predicated region
    $region2: #{tpu_custom_call.1} parent=1 // pred_check
      _
    $region3: #{tpu_custom_call.1} parent=1 // pred_check_branch
      %12 = sbr.rel (0) target = $region5
    $region4: #{tpu_custom_call.1} parent=1 // pred_region
      %s14 = ssub.s32 2560, 2560
      %15 = vsyncadd [#allocation3], %s14
      %s16 = sshll.u32 [#allocation2], 4
      %s17 = int_to_ptr.vmem [resolvable:$true] %s16
      %22 = dma.hbm_to_vmem [thread:$0]  %s0, 2560, %s17, [#allocation3], 512, 512, 32
    $region5: #{tpu_custom_call.1} parent=1 // pred_fallthru
      _
    // Predicated region
    $region6: #{tpu_custom_call.1} parent=1 // pred_check
      _
    $region7: #{tpu_custom_call.1} parent=1 // pred_check_branch
      %24 = sbr.rel (0) target = $region9
    $region8: #{tpu_custom_call.1} parent=1 // pred_region
      %s26 = ssub.s32 32768, 32768
      %27 = vsyncadd [#allocation6], %s26
      %s28 = sshll.u32 [#allocation5], 4
      %s29 = int_to_ptr.vmem [resolvable:$true] %s28
      %34 = dma.hbm_to_vmem [thread:$0]  %s1, 32768, %s29, [#allocation6], 512, 512, 32
    $region9: #{tpu_custom_call.1} parent=1 // pred_fallthru
      _
    // Predicated region
    $region10: #{tpu_custom_call.1} parent=1 // pred_check
      _
    $region11: #{tpu_custom_call.1} parent=1 // pred_check_branch
      %36 = sbr.rel (0) target = $region13
    $region12: #{tpu_custom_call.1} parent=1 // pred_region
      %s38 = ssub.s32 64, 64
      %39 = vsyncadd [#allocation6], %s38
      %s41 = sshll.u32 [#allocation7], 4
      %s42 = int_to_ptr.vmem [resolvable:$true] %s41
      %44 = dma.hbm_to_vmem [thread:$0]  %s2, 64, %s42, [#allocation6]
    $region13: #{tpu_custom_call.1} parent=1 // pred_fallthru
      _
    // Predicated region
    $region14: #{tpu_custom_call.1} parent=1 // pred_check
      _
    $region15: #{tpu_custom_call.1} parent=1 // pred_check_branch
      %46 = sbr.rel (0) target = $region17
    $region16: #{tpu_custom_call.1} parent=1 // pred_region
      %47 = dma.done [#allocation3], 2560
    $region17: #{tpu_custom_call.1} parent=1 // pred_fallthru
      _
    // Predicated region
    $region18: #{tpu_custom_call.1} parent=1 // pred_check
      _
    $region19: #{tpu_custom_call.1} parent=1 // pred_check_branch
      %49 = sbr.rel (0) target = $region21
    $region20: #{tpu_custom_call.1} parent=1 // pred_region
      %50 = dma.done [#allocation6], 32768
    $region21: #{tpu_custom_call.1} parent=1 // pred_fallthru
      _
    // Predicated region
    $region22: #{tpu_custom_call.1} parent=1 // pred_check
      _
    $region23: #{tpu_custom_call.1} parent=1 // pred_check_branch
      %52 = sbr.rel (0) target = $region25
    $region24: #{tpu_custom_call.1} parent=1 // pred_region
      %53 = dma.done [#allocation6], 64
    $region25: #{tpu_custom_call.1} parent=1 // pred_fallthru
      _
    %v54 = vld [vmem:[#allocation2] sm:$0xff]
    %v55 = vld [vmem:[#allocation2 + $0x8] sm:$0xff]
    %v56 = vld [vmem:[#allocation2 + $0x10] sm:$0xff]
    %v57 = vld [vmem:[#allocation2 + $0x18] sm:$0xff]
    %v58 = vld [vmem:[#allocation2 + $0x20] sm:$0xff]
    %v59 = vld [vmem:[#allocation2 + $0x28] sm:$0xff]
    %v60 = vld [vmem:[#allocation2 + $0x30] sm:$0xff]
    %v61 = vld [vmem:[#allocation2 + $0x38] sm:$0xff]
    %v62 = vld [vmem:[#allocation2 + $0x40] sm:$0xff]
    %v63 = vld [vmem:[#allocation2 + $0x48] sm:$0xff]
    %v64 = vld [vmem:[#allocation2 + $0x50] sm:$0xff]
    %v65 = vld [vmem:[#allocation2 + $0x58] sm:$0xff]
    %v66 = vld [vmem:[#allocation2 + $0x60] sm:$0xff]
    %v67 = vld [vmem:[#allocation2 + $0x68] sm:$0xff]
    %v68 = vld [vmem:[#allocation2 + $0x70] sm:$0xff]
    %v69 = vld [vmem:[#allocation2 + $0x78] sm:$0xff]
    %v70 = vld [vmem:[#allocation2 + $0x80] sm:$0xff]
    %v71 = vld [vmem:[#allocation2 + $0x88] sm:$0xff]
    %v72 = vld [vmem:[#allocation2 + $0x90] sm:$0xff]
    %v73 = vld [vmem:[#allocation2 + $0x98] sm:$0xff]
    %v74 = vld [vmem:[#allocation5] sm:$0xff]
    %v75 = vld [vmem:[#allocation5 + $0x8] sm:$0xff]
    %v76 = vld [vmem:[#allocation5 + $0x10] sm:$0xff]
    %v77 = vld [vmem:[#allocation5 + $0x18] sm:$0xff]
    %v78 = vld [vmem:[#allocation5 + $0x20] sm:$0xff]
    %v79 = vld [vmem:[#allocation5 + $0x28] sm:$0xff]
    %v80 = vld [vmem:[#allocation5 + $0x30] sm:$0xff]
    %v81 = vld [vmem:[#allocation5 + $0x38] sm:$0xff]
    %v82 = vld [vmem:[#allocation5 + $0x40] sm:$0xff]
    %v83 = vld [vmem:[#allocation5 + $0x48] sm:$0xff]
    %v84 = vld [vmem:[#allocation5 + $0x50] sm:$0xff]
    %v85 = vld [vmem:[#allocation5 + $0x58] sm:$0xff]
    %v86 = vld [vmem:[#allocation5 + $0x60] sm:$0xff]
    %v87 = vld [vmem:[#allocation5 + $0x68] sm:$0xff]
    %v88 = vld [vmem:[#allocation5 + $0x70] sm:$0xff]
    %v89 = vld [vmem:[#allocation5 + $0x78] sm:$0xff]
    %v90 = vld [vmem:[#allocation5 + $0x80] sm:$0xff]
    %v91 = vld [vmem:[#allocation5 + $0x88] sm:$0xff]
    %v92 = vld [vmem:[#allocation5 + $0x90] sm:$0xff]
    %v93 = vld [vmem:[#allocation5 + $0x98] sm:$0xff]
    %v94 = vld [vmem:[#allocation5 + $0xa0] sm:$0xff]
    %v95 = vld [vmem:[#allocation5 + $0xa8] sm:$0xff]
    %v96 = vld [vmem:[#allocation5 + $0xb0] sm:$0xff]
    %v97 = vld [vmem:[#allocation5 + $0xb8] sm:$0xff]
    %v98 = vld [vmem:[#allocation5 + $0xc0] sm:$0xff]
    %v99 = vld [vmem:[#allocation5 + $0xc8] sm:$0xff]
    %v100 = vld [vmem:[#allocation5 + $0xd0] sm:$0xff]
    %v101 = vld [vmem:[#allocation5 + $0xd8] sm:$0xff]
    %v102 = vld [vmem:[#allocation5 + $0xe0] sm:$0xff]
    %v103 = vld [vmem:[#allocation5 + $0xe8] sm:$0xff]
    %v104 = vld [vmem:[#allocation5 + $0xf0] sm:$0xff]
    %v105 = vld [vmem:[#allocation5 + $0xf8] sm:$0xff]
    %v106 = vld [vmem:[#allocation5 + $0x100] sm:$0xff]
    %v107 = vld [vmem:[#allocation5 + $0x108] sm:$0xff]
    %v108 = vld [vmem:[#allocation5 + $0x110] sm:$0xff]
    %v109 = vld [vmem:[#allocation5 + $0x118] sm:$0xff]
    %v110 = vld [vmem:[#allocation5 + $0x120] sm:$0xff]
    %v111 = vld [vmem:[#allocation5 + $0x128] sm:$0xff]
    %v112 = vld [vmem:[#allocation5 + $0x130] sm:$0xff]
    %v113 = vld [vmem:[#allocation5 + $0x138] sm:$0xff]
    %v114 = vld [vmem:[#allocation5 + $0x140] sm:$0xff]
    %v115 = vld [vmem:[#allocation5 + $0x148] sm:$0xff]
    %v116 = vld [vmem:[#allocation5 + $0x150] sm:$0xff]
    %v117 = vld [vmem:[#allocation5 + $0x158] sm:$0xff]
    %v118 = vld [vmem:[#allocation5 + $0x160] sm:$0xff]
    %v119 = vld [vmem:[#allocation5 + $0x168] sm:$0xff]
    %v120 = vld [vmem:[#allocation5 + $0x170] sm:$0xff]
    %v121 = vld [vmem:[#allocation5 + $0x178] sm:$0xff]
    %v122 = vld [vmem:[#allocation5 + $0x180] sm:$0xff]
    %v123 = vld [vmem:[#allocation5 + $0x188] sm:$0xff]
    %v124 = vld [vmem:[#allocation5 + $0x190] sm:$0xff]
    %v125 = vld [vmem:[#allocation5 + $0x198] sm:$0xff]
    %v126 = vld [vmem:[#allocation5 + $0x1a0] sm:$0xff]
    %v127 = vld [vmem:[#allocation5 + $0x1a8] sm:$0xff]
    %v128 = vld [vmem:[#allocation5 + $0x1b0] sm:$0xff]
    %v129 = vld [vmem:[#allocation5 + $0x1b8] sm:$0xff]
    %v130 = vld [vmem:[#allocation5 + $0x1c0] sm:$0xff]
    %v131 = vld [vmem:[#allocation5 + $0x1c8] sm:$0xff]
    %v132 = vld [vmem:[#allocation5 + $0x1d0] sm:$0xff]
    %v133 = vld [vmem:[#allocation5 + $0x1d8] sm:$0xff]
    %v134 = vld [vmem:[#allocation5 + $0x1e0] sm:$0xff]
    %v135 = vld [vmem:[#allocation5 + $0x1e8] sm:$0xff]
    %v136 = vld [vmem:[#allocation5 + $0x1f0] sm:$0xff]
    %v137 = vld [vmem:[#allocation5 + $0x1f8] sm:$0xff]
    %v138 = vld [vmem:[#allocation5 + $0x200] sm:$0xff]
    %v139 = vld [vmem:[#allocation5 + $0x208] sm:$0xff]
    %v140 = vld [vmem:[#allocation5 + $0x210] sm:$0xff]
    %v141 = vld [vmem:[#allocation5 + $0x218] sm:$0xff]
    %v142 = vld [vmem:[#allocation5 + $0x220] sm:$0xff]
    %v143 = vld [vmem:[#allocation5 + $0x228] sm:$0xff]
    %v144 = vld [vmem:[#allocation5 + $0x230] sm:$0xff]
    %v145 = vld [vmem:[#allocation5 + $0x238] sm:$0xff]
    %v146 = vld [vmem:[#allocation5 + $0x240] sm:$0xff]
    %v147 = vld [vmem:[#allocation5 + $0x248] sm:$0xff]
    %v148 = vld [vmem:[#allocation5 + $0x250] sm:$0xff]
    %v149 = vld [vmem:[#allocation5 + $0x258] sm:$0xff]
    %v150 = vld [vmem:[#allocation5 + $0x260] sm:$0xff]
    %v151 = vld [vmem:[#allocation5 + $0x268] sm:$0xff]
    %v152 = vld [vmem:[#allocation5 + $0x270] sm:$0xff]
    %v153 = vld [vmem:[#allocation5 + $0x278] sm:$0xff]
    %v154 = vld [vmem:[#allocation5 + $0x280] sm:$0xff]
    %v155 = vld [vmem:[#allocation5 + $0x288] sm:$0xff]
    %v156 = vld [vmem:[#allocation5 + $0x290] sm:$0xff]
    %v157 = vld [vmem:[#allocation5 + $0x298] sm:$0xff]
    %v158 = vld [vmem:[#allocation5 + $0x2a0] sm:$0xff]
    %v159 = vld [vmem:[#allocation5 + $0x2a8] sm:$0xff]
    %v160 = vld [vmem:[#allocation5 + $0x2b0] sm:$0xff]
    %v161 = vld [vmem:[#allocation5 + $0x2b8] sm:$0xff]
    %v162 = vld [vmem:[#allocation5 + $0x2c0] sm:$0xff]
    %v163 = vld [vmem:[#allocation5 + $0x2c8] sm:$0xff]
    %v164 = vld [vmem:[#allocation5 + $0x2d0] sm:$0xff]
    %v165 = vld [vmem:[#allocation5 + $0x2d8] sm:$0xff]
    %v166 = vld [vmem:[#allocation5 + $0x2e0] sm:$0xff]
    %v167 = vld [vmem:[#allocation5 + $0x2e8] sm:$0xff]
    %v168 = vld [vmem:[#allocation5 + $0x2f0] sm:$0xff]
    %v169 = vld [vmem:[#allocation5 + $0x2f8] sm:$0xff]
    %v170 = vld [vmem:[#allocation5 + $0x300] sm:$0xff]
    %v171 = vld [vmem:[#allocation5 + $0x308] sm:$0xff]
    %v172 = vld [vmem:[#allocation5 + $0x310] sm:$0xff]
    %v173 = vld [vmem:[#allocation5 + $0x318] sm:$0xff]
    %v174 = vld [vmem:[#allocation5 + $0x320] sm:$0xff]
    %v175 = vld [vmem:[#allocation5 + $0x328] sm:$0xff]
    %v176 = vld [vmem:[#allocation5 + $0x330] sm:$0xff]
    %v177 = vld [vmem:[#allocation5 + $0x338] sm:$0xff]
    %v178 = vld [vmem:[#allocation5 + $0x340] sm:$0xff]
    %v179 = vld [vmem:[#allocation5 + $0x348] sm:$0xff]
    %v180 = vld [vmem:[#allocation5 + $0x350] sm:$0xff]
    %v181 = vld [vmem:[#allocation5 + $0x358] sm:$0xff]
    %v182 = vld [vmem:[#allocation5 + $0x360] sm:$0xff]
    %v183 = vld [vmem:[#allocation5 + $0x368] sm:$0xff]
    %v184 = vld [vmem:[#allocation5 + $0x370] sm:$0xff]
    %v185 = vld [vmem:[#allocation5 + $0x378] sm:$0xff]
    %v186 = vld [vmem:[#allocation5 + $0x380] sm:$0xff]
    %v187 = vld [vmem:[#allocation5 + $0x388] sm:$0xff]
    %v188 = vld [vmem:[#allocation5 + $0x390] sm:$0xff]
    %v189 = vld [vmem:[#allocation5 + $0x398] sm:$0xff]
    %v190 = vld [vmem:[#allocation5 + $0x3a0] sm:$0xff]
    %v191 = vld [vmem:[#allocation5 + $0x3a8] sm:$0xff]
    %v192 = vld [vmem:[#allocation5 + $0x3b0] sm:$0xff]
    %v193 = vld [vmem:[#allocation5 + $0x3b8] sm:$0xff]
    %v194 = vld [vmem:[#allocation5 + $0x3c0] sm:$0xff]
    %v195 = vld [vmem:[#allocation5 + $0x3c8] sm:$0xff]
    %v196 = vld [vmem:[#allocation5 + $0x3d0] sm:$0xff]
    %v197 = vld [vmem:[#allocation5 + $0x3d8] sm:$0xff]
    %v198 = vld [vmem:[#allocation5 + $0x3e0] sm:$0xff]
    %v199 = vld [vmem:[#allocation5 + $0x3e8] sm:$0xff]
    %v200 = vld [vmem:[#allocation5 + $0x3f0] sm:$0xff]
    %v201 = vld [vmem:[#allocation5 + $0x3f8] sm:$0xff]
    %v202 = vld [vmem:[#allocation5 + $0x400] sm:$0xff]
    %v203 = vld [vmem:[#allocation5 + $0x408] sm:$0xff]
    %v204 = vld [vmem:[#allocation5 + $0x410] sm:$0xff]
    %v205 = vld [vmem:[#allocation5 + $0x418] sm:$0xff]
    %v206 = vld [vmem:[#allocation5 + $0x420] sm:$0xff]
    %v207 = vld [vmem:[#allocation5 + $0x428] sm:$0xff]
    %v208 = vld [vmem:[#allocation5 + $0x430] sm:$0xff]
    %v209 = vld [vmem:[#allocation5 + $0x438] sm:$0xff]
    %v210 = vld [vmem:[#allocation5 + $0x440] sm:$0xff]
    %v211 = vld [vmem:[#allocation5 + $0x448] sm:$0xff]
    %v212 = vld [vmem:[#allocation5 + $0x450] sm:$0xff]
    %v213 = vld [vmem:[#allocation5 + $0x458] sm:$0xff]
    %v214 = vld [vmem:[#allocation5 + $0x460] sm:$0xff]
    %v215 = vld [vmem:[#allocation5 + $0x468] sm:$0xff]
    %v216 = vld [vmem:[#allocation5 + $0x470] sm:$0xff]
    %v217 = vld [vmem:[#allocation5 + $0x478] sm:$0xff]
    %v218 = vld [vmem:[#allocation5 + $0x480] sm:$0xff]
    %v219 = vld [vmem:[#allocation5 + $0x488] sm:$0xff]
    %v220 = vld [vmem:[#allocation5 + $0x490] sm:$0xff]
    %v221 = vld [vmem:[#allocation5 + $0x498] sm:$0xff]
    %v222 = vld [vmem:[#allocation5 + $0x4a0] sm:$0xff]
    %v223 = vld [vmem:[#allocation5 + $0x4a8] sm:$0xff]
    %v224 = vld [vmem:[#allocation5 + $0x4b0] sm:$0xff]
    %v225 = vld [vmem:[#allocation5 + $0x4b8] sm:$0xff]
    %v226 = vld [vmem:[#allocation5 + $0x4c0] sm:$0xff]
    %v227 = vld [vmem:[#allocation5 + $0x4c8] sm:$0xff]
    %v228 = vld [vmem:[#allocation5 + $0x4d0] sm:$0xff]
    %v229 = vld [vmem:[#allocation5 + $0x4d8] sm:$0xff]
    %v230 = vld [vmem:[#allocation5 + $0x4e0] sm:$0xff]
    %v231 = vld [vmem:[#allocation5 + $0x4e8] sm:$0xff]
    %v232 = vld [vmem:[#allocation5 + $0x4f0] sm:$0xff]
    %v233 = vld [vmem:[#allocation5 + $0x4f8] sm:$0xff]
    %v234 = vld [vmem:[#allocation5 + $0x500] sm:$0xff]
    %v235 = vld [vmem:[#allocation5 + $0x508] sm:$0xff]
    %v236 = vld [vmem:[#allocation5 + $0x510] sm:$0xff]
    %v237 = vld [vmem:[#allocation5 + $0x518] sm:$0xff]
    %v238 = vld [vmem:[#allocation5 + $0x520] sm:$0xff]
    %v239 = vld [vmem:[#allocation5 + $0x528] sm:$0xff]
    %v240 = vld [vmem:[#allocation5 + $0x530] sm:$0xff]
    %v241 = vld [vmem:[#allocation5 + $0x538] sm:$0xff]
    %v242 = vld [vmem:[#allocation5 + $0x540] sm:$0xff]
    %v243 = vld [vmem:[#allocation5 + $0x548] sm:$0xff]
    %v244 = vld [vmem:[#allocation5 + $0x550] sm:$0xff]
    %v245 = vld [vmem:[#allocation5 + $0x558] sm:$0xff]
    %v246 = vld [vmem:[#allocation5 + $0x560] sm:$0xff]
    %v247 = vld [vmem:[#allocation5 + $0x568] sm:$0xff]
    %v248 = vld [vmem:[#allocation5 + $0x570] sm:$0xff]
    %v249 = vld [vmem:[#allocation5 + $0x578] sm:$0xff]
    %v250 = vld [vmem:[#allocation5 + $0x580] sm:$0xff]
    %v251 = vld [vmem:[#allocation5 + $0x588] sm:$0xff]
    %v252 = vld [vmem:[#allocation5 + $0x590] sm:$0xff]
    %v253 = vld [vmem:[#allocation5 + $0x598] sm:$0xff]
    %v254 = vld [vmem:[#allocation5 + $0x5a0] sm:$0xff]
    %v255 = vld [vmem:[#allocation5 + $0x5a8] sm:$0xff]
    %v256 = vld [vmem:[#allocation5 + $0x5b0] sm:$0xff]
    %v257 = vld [vmem:[#allocation5 + $0x5b8] sm:$0xff]
    %v258 = vld [vmem:[#allocation5 + $0x5c0] sm:$0xff]
    %v259 = vld [vmem:[#allocation5 + $0x5c8] sm:$0xff]
    %v260 = vld [vmem:[#allocation5 + $0x5d0] sm:$0xff]
    %v261 = vld [vmem:[#allocation5 + $0x5d8] sm:$0xff]
    %v262 = vld [vmem:[#allocation5 + $0x5e0] sm:$0xff]
    %v263 = vld [vmem:[#allocation5 + $0x5e8] sm:$0xff]
    %v264 = vld [vmem:[#allocation5 + $0x5f0] sm:$0xff]
    %v265 = vld [vmem:[#allocation5 + $0x5f8] sm:$0xff]
    %v266 = vld [vmem:[#allocation5 + $0x600] sm:$0xff]
    %v267 = vld [vmem:[#allocation5 + $0x608] sm:$0xff]
    %v268 = vld [vmem:[#allocation5 + $0x610] sm:$0xff]
    %v269 = vld [vmem:[#allocation5 + $0x618] sm:$0xff]
    %v270 = vld [vmem:[#allocation5 + $0x620] sm:$0xff]
    %v271 = vld [vmem:[#allocation5 + $0x628] sm:$0xff]
    %v272 = vld [vmem:[#allocation5 + $0x630] sm:$0xff]
    %v273 = vld [vmem:[#allocation5 + $0x638] sm:$0xff]
    %v274 = vld [vmem:[#allocation5 + $0x640] sm:$0xff]
    %v275 = vld [vmem:[#allocation5 + $0x648] sm:$0xff]
    %v276 = vld [vmem:[#allocation5 + $0x650] sm:$0xff]
    %v277 = vld [vmem:[#allocation5 + $0x658] sm:$0xff]
    %v278 = vld [vmem:[#allocation5 + $0x660] sm:$0xff]
    %v279 = vld [vmem:[#allocation5 + $0x668] sm:$0xff]
    %v280 = vld [vmem:[#allocation5 + $0x670] sm:$0xff]
    %v281 = vld [vmem:[#allocation5 + $0x678] sm:$0xff]
    %v282 = vld [vmem:[#allocation5 + $0x680] sm:$0xff]
    %v283 = vld [vmem:[#allocation5 + $0x688] sm:$0xff]
    %v284 = vld [vmem:[#allocation5 + $0x690] sm:$0xff]
    %v285 = vld [vmem:[#allocation5 + $0x698] sm:$0xff]
    %v286 = vld [vmem:[#allocation5 + $0x6a0] sm:$0xff]
    %v287 = vld [vmem:[#allocation5 + $0x6a8] sm:$0xff]
    %v288 = vld [vmem:[#allocation5 + $0x6b0] sm:$0xff]
    %v289 = vld [vmem:[#allocation5 + $0x6b8] sm:$0xff]
    %v290 = vld [vmem:[#allocation5 + $0x6c0] sm:$0xff]
    %v291 = vld [vmem:[#allocation5 + $0x6c8] sm:$0xff]
    %v292 = vld [vmem:[#allocation5 + $0x6d0] sm:$0xff]
    %v293 = vld [vmem:[#allocation5 + $0x6d8] sm:$0xff]
    %v294 = vld [vmem:[#allocation5 + $0x6e0] sm:$0xff]
    %v295 = vld [vmem:[#allocation5 + $0x6e8] sm:$0xff]
    %v296 = vld [vmem:[#allocation5 + $0x6f0] sm:$0xff]
    %v297 = vld [vmem:[#allocation5 + $0x6f8] sm:$0xff]
    %v298 = vld [vmem:[#allocation5 + $0x700] sm:$0xff]
    %v299 = vld [vmem:[#allocation5 + $0x708] sm:$0xff]
    %v300 = vld [vmem:[#allocation5 + $0x710] sm:$0xff]
    %v301 = vld [vmem:[#allocation5 + $0x718] sm:$0xff]
    %v302 = vld [vmem:[#allocation5 + $0x720] sm:$0xff]
    %v303 = vld [vmem:[#allocation5 + $0x728] sm:$0xff]
    %v304 = vld [vmem:[#allocation5 + $0x730] sm:$0xff]
    %v305 = vld [vmem:[#allocation5 + $0x738] sm:$0xff]
    %v306 = vld [vmem:[#allocation5 + $0x740] sm:$0xff]
    %v307 = vld [vmem:[#allocation5 + $0x748] sm:$0xff]
    %v308 = vld [vmem:[#allocation5 + $0x750] sm:$0xff]
    %v309 = vld [vmem:[#allocation5 + $0x758] sm:$0xff]
    %v310 = vld [vmem:[#allocation5 + $0x760] sm:$0xff]
    %v311 = vld [vmem:[#allocation5 + $0x768] sm:$0xff]
    %v312 = vld [vmem:[#allocation5 + $0x770] sm:$0xff]
    %v313 = vld [vmem:[#allocation5 + $0x778] sm:$0xff]
    %v314 = vld [vmem:[#allocation5 + $0x780] sm:$0xff]
    %v315 = vld [vmem:[#allocation5 + $0x788] sm:$0xff]
    %v316 = vld [vmem:[#allocation5 + $0x790] sm:$0xff]
    %v317 = vld [vmem:[#allocation5 + $0x798] sm:$0xff]
    %v318 = vld [vmem:[#allocation5 + $0x7a0] sm:$0xff]
    %v319 = vld [vmem:[#allocation5 + $0x7a8] sm:$0xff]
    %v320 = vld [vmem:[#allocation5 + $0x7b0] sm:$0xff]
    %v321 = vld [vmem:[#allocation5 + $0x7b8] sm:$0xff]
    %v322 = vld [vmem:[#allocation5 + $0x7c0] sm:$0xff]
    %v323 = vld [vmem:[#allocation5 + $0x7c8] sm:$0xff]
    %v324 = vld [vmem:[#allocation5 + $0x7d0] sm:$0xff]
    %v325 = vld [vmem:[#allocation5 + $0x7d8] sm:$0xff]
    %v326 = vld [vmem:[#allocation5 + $0x7e0] sm:$0xff]
    %v327 = vld [vmem:[#allocation5 + $0x7e8] sm:$0xff]
    %v328 = vld [vmem:[#allocation5 + $0x7f0] sm:$0xff]
    %v329 = vld [vmem:[#allocation5 + $0x7f8] sm:$0xff]
    %v330 = vld [vmem:[#allocation7] sm:$0xf]
    %v332 = vlaneseq
    %v333 = vshrl.u32 %v332, 7
    %v334 = vsub.s32 0, %v333
    %v335 = vrot.slane %v330, %v334
    %v336 = vlaneseq
    %v337 = vshrl.u32 %v336, 7
    %v338 = vsub.s32 1, %v337
    %v339 = vrot.slane %v330, %v338
    %v340 = vlaneseq
    %v341 = vshrl.u32 %v340, 7
    %v342 = vsub.s32 2, %v341
    %v343 = vrot.slane %v330, %v342
    %v344 = vlaneseq
    %v345 = vshrl.u32 %v344, 7
    %v346 = vsub.s32 3, %v345
    %v347 = vrot.slane %v330, %v346
    %352 = vmatprep.subr.mxu0 %v135
    %353 = vmatpush1.msra.mxu0 %v134
    %354 = vmatprep.subr.mxu0 %v131
    %355 = vmatpush1.msra.mxu0 %v130
    %356 = vmatprep.subr.mxu0 %v127
    %357 = vmatpush1.msra.mxu0 %v126
    %358 = vmatprep.subr.mxu0 %v123
    %359 = vmatpush1.msra.mxu0 %v122
    %360 = vmatprep.subr.mxu0 %v119
    %361 = vmatpush1.msra.mxu0 %v118
    %362 = vmatprep.subr.mxu0 %v115
    %363 = vmatpush1.msra.mxu0 %v114
    %364 = vmatprep.subr.mxu0 %v111
    %365 = vmatpush1.msra.mxu0 %v110
    %366 = vmatprep.subr.mxu0 %v107
    %367 = vmatpush1.msra.mxu0 %v106
    %368 = vmatprep.subr.mxu0 %v103
    %369 = vmatpush1.msra.mxu0 %v102
    %370 = vmatprep.subr.mxu0 %v99
    %371 = vmatpush1.msra.mxu0 %v98
    %372 = vmatprep.subr.mxu0 %v95
    %373 = vmatpush1.msra.mxu0 %v94
    %374 = vmatprep.subr.mxu0 %v91
    %375 = vmatpush1.msra.mxu0 %v90
    %376 = vmatprep.subr.mxu0 %v87
    %377 = vmatpush1.msra.mxu0 %v86
    %378 = vmatprep.subr.mxu0 %v83
    %379 = vmatpush1.msra.mxu0 %v82
    %380 = vmatprep.subr.mxu0 %v79
    %381 = vmatpush1.msra.mxu0 %v78
    %382 = vmatprep.subr.mxu0 %v75
    %383 = vmatpush1.msra.mxu0 %v74
    %384 = vmatprep.subr.mxu0 %v199
    %385 = vmatpush2.msra.mxu0 %v198
    %386 = vmatprep.subr.mxu0 %v195
    %387 = vmatpush2.msra.mxu0 %v194
    %388 = vmatprep.subr.mxu0 %v191
    %389 = vmatpush2.msra.mxu0 %v190
    %390 = vmatprep.subr.mxu0 %v187
    %391 = vmatpush2.msra.mxu0 %v186
    %392 = vmatprep.subr.mxu0 %v183
    %393 = vmatpush2.msra.mxu0 %v182
    %394 = vmatprep.subr.mxu0 %v179
    %395 = vmatpush2.msra.mxu0 %v178
    %396 = vmatprep.subr.mxu0 %v175
    %397 = vmatpush2.msra.mxu0 %v174
    %398 = vmatprep.subr.mxu0 %v171
    %399 = vmatpush2.msra.mxu0 %v170
    %400 = vmatprep.subr.mxu0 %v167
    %401 = vmatpush2.msra.mxu0 %v166
    %402 = vmatprep.subr.mxu0 %v163
    %403 = vmatpush2.msra.mxu0 %v162
    %404 = vmatprep.subr.mxu0 %v159
    %405 = vmatpush2.msra.mxu0 %v158
    %406 = vmatprep.subr.mxu0 %v155
    %407 = vmatpush2.msra.mxu0 %v154
    %408 = vmatprep.subr.mxu0 %v151
    %409 = vmatpush2.msra.mxu0 %v150
    %410 = vmatprep.subr.mxu0 %v147
    %411 = vmatpush2.msra.mxu0 %v146
    %412 = vmatprep.subr.mxu0 %v143
    %413 = vmatpush2.msra.mxu0 %v142
    %414 = vmatprep.subr.mxu0 %v139
    %415 = vmatpush2.msra.mxu0 %v138
    %416 = vmatprep.mubr.f32.mxu0 %v55
    %417 = vmatmul.mubr.f32.gmra.mxu0 %v54
    %v418 = vpop.f32.mrf.mxu0
    %v419 = vadd.f32 %v335, %v418
    %v420 = vpop.f32.mrf.mxu0
    %v421 = vadd.f32 %v339, %v420
    %422 = vmatprep.mubr.f32.mxu0 %v59
    %423 = vmatmul.mubr.f32.gmra.mxu0 %v58
    %v424 = vpop.f32.mrf.mxu0
    %v425 = vadd.f32 %v335, %v424
    %v426 = vpop.f32.mrf.mxu0
    %v427 = vadd.f32 %v339, %v426
    %428 = vmatprep.mubr.f32.mxu0 %v63
    %429 = vmatmul.mubr.f32.gmra.mxu0 %v62
    %v430 = vpop.f32.mrf.mxu0
    %v431 = vadd.f32 %v335, %v430
    %v432 = vpop.f32.mrf.mxu0
    %v433 = vadd.f32 %v339, %v432
    %434 = vmatprep.mubr.f32.mxu0 %v67
    %435 = vmatmul.mubr.f32.gmra.mxu0 %v66
    %v436 = vpop.f32.mrf.mxu0
    %v437 = vadd.f32 %v335, %v436
    %v438 = vpop.f32.mrf.mxu0
    %v439 = vadd.f32 %v339, %v438
    %440 = vmatprep.mubr.f32.mxu0 %v71
    %441 = vmatmul.mubr.f32.gmra.mxu0 %v70
    %v442 = vpop.f32.mrf.mxu0
    %v443 = vadd.f32 %v335, %v442
    %v444 = vpop.f32.mrf.mxu0
    %v445 = vadd.f32 %v339, %v444
    %446 = vdwg.mxu0
    %447 = vmatprep.subr.mxu0 %v263
    %448 = vmatpush1.msra.mxu0 %v262
    %449 = vmatprep.subr.mxu0 %v259
    %450 = vmatpush1.msra.mxu0 %v258
    %451 = vmatprep.subr.mxu0 %v255
    %452 = vmatpush1.msra.mxu0 %v254
    %453 = vmatprep.subr.mxu0 %v251
    %454 = vmatpush1.msra.mxu0 %v250
    %455 = vmatprep.subr.mxu0 %v247
    %456 = vmatpush1.msra.mxu0 %v246
    %457 = vmatprep.subr.mxu0 %v243
    %458 = vmatpush1.msra.mxu0 %v242
    %459 = vmatprep.subr.mxu0 %v239
    %460 = vmatpush1.msra.mxu0 %v238
    %461 = vmatprep.subr.mxu0 %v235
    %462 = vmatpush1.msra.mxu0 %v234
    %463 = vmatprep.subr.mxu0 %v231
    %464 = vmatpush1.msra.mxu0 %v230
    %465 = vmatprep.subr.mxu0 %v227
    %466 = vmatpush1.msra.mxu0 %v226
    %467 = vmatprep.subr.mxu0 %v223
    %468 = vmatpush1.msra.mxu0 %v222
    %469 = vmatprep.subr.mxu0 %v219
    %470 = vmatpush1.msra.mxu0 %v218
    %471 = vmatprep.subr.mxu0 %v215
    %472 = vmatpush1.msra.mxu0 %v214
    %473 = vmatprep.subr.mxu0 %v211
    %474 = vmatpush1.msra.mxu0 %v210
    %475 = vmatprep.subr.mxu0 %v207
    %476 = vmatpush1.msra.mxu0 %v206
    %477 = vmatprep.subr.mxu0 %v203
    %478 = vmatpush1.msra.mxu0 %v202
    %479 = vmatprep.subr.mxu0 %v327
    %480 = vmatpush2.msra.mxu0 %v326
    %481 = vmatprep.subr.mxu0 %v323
    %482 = vmatpush2.msra.mxu0 %v322
    %483 = vmatprep.subr.mxu0 %v319
    %484 = vmatpush2.msra.mxu0 %v318
    %485 = vmatprep.subr.mxu0 %v315
    %486 = vmatpush2.msra.mxu0 %v314
    %487 = vmatprep.subr.mxu0 %v311
    %488 = vmatpush2.msra.mxu0 %v310
    %489 = vmatprep.subr.mxu0 %v307
    %490 = vmatpush2.msra.mxu0 %v306
    %491 = vmatprep.subr.mxu0 %v303
    %492 = vmatpush2.msra.mxu0 %v302
    %493 = vmatprep.subr.mxu0 %v299
    %494 = vmatpush2.msra.mxu0 %v298
    %495 = vmatprep.subr.mxu0 %v295
    %496 = vmatpush2.msra.mxu0 %v294
    %497 = vmatprep.subr.mxu0 %v291
    %498 = vmatpush2.msra.mxu0 %v290
    %499 = vmatprep.subr.mxu0 %v287
    %500 = vmatpush2.msra.mxu0 %v286
    %501 = vmatprep.subr.mxu0 %v283
    %502 = vmatpush2.msra.mxu0 %v282
    %503 = vmatprep.subr.mxu0 %v279
    %504 = vmatpush2.msra.mxu0 %v278
    %505 = vmatprep.subr.mxu0 %v275
    %506 = vmatpush2.msra.mxu0 %v274
    %507 = vmatprep.subr.mxu0 %v271
    %508 = vmatpush2.msra.mxu0 %v270
    %509 = vmatprep.subr.mxu0 %v267
    %510 = vmatpush2.msra.mxu0 %v266
    %511 = vmatprep.mubr.f32.mxu0 %v57
    %512 = vmatmul.mubr.f32.gmra.mxu0 %v56
    %v513 = vpop.f32.mrf.mxu0
    %v514 = vadd.f32 %v419, %v513
    %v515 = vpop.f32.mrf.mxu0
    %v516 = vadd.f32 %v421, %v515
    %517 = vmatprep.mubr.f32.mxu0 %v61
    %518 = vmatmul.mubr.f32.gmra.mxu0 %v60
    %v519 = vpop.f32.mrf.mxu0
    %v520 = vadd.f32 %v425, %v519
    %v521 = vpop.f32.mrf.mxu0
    %v522 = vadd.f32 %v427, %v521
    %523 = vmatprep.mubr.f32.mxu0 %v65
    %524 = vmatmul.mubr.f32.gmra.mxu0 %v64
    %v525 = vpop.f32.mrf.mxu0
    %v526 = vadd.f32 %v431, %v525
    %v527 = vpop.f32.mrf.mxu0
    %v528 = vadd.f32 %v433, %v527
    %529 = vmatprep.mubr.f32.mxu0 %v69
    %530 = vmatmul.mubr.f32.gmra.mxu0 %v68
    %v531 = vpop.f32.mrf.mxu0
    %v532 = vadd.f32 %v437, %v531
    %v533 = vpop.f32.mrf.mxu0
    %v534 = vadd.f32 %v439, %v533
    %535 = vmatprep.mubr.f32.mxu0 %v73
    %536 = vmatmul.mubr.f32.gmra.mxu0 %v72
    %v537 = vpop.f32.mrf.mxu0
    %v538 = vadd.f32 %v443, %v537
    %v539 = vpop.f32.mrf.mxu0
    %v540 = vadd.f32 %v445, %v539
    %541 = vdwg.mxu0
    %542 = vmatprep.subr.mxu0 %v137
    %543 = vmatpush1.msra.mxu0 %v136
    %544 = vmatprep.subr.mxu0 %v133
    %545 = vmatpush1.msra.mxu0 %v132
    %546 = vmatprep.subr.mxu0 %v129
    %547 = vmatpush1.msra.mxu0 %v128
    %548 = vmatprep.subr.mxu0 %v125
    %549 = vmatpush1.msra.mxu0 %v124
    %550 = vmatprep.subr.mxu0 %v121
    %551 = vmatpush1.msra.mxu0 %v120
    %552 = vmatprep.subr.mxu0 %v117
    %553 = vmatpush1.msra.mxu0 %v116
    %554 = vmatprep.subr.mxu0 %v113
    %555 = vmatpush1.msra.mxu0 %v112
    %556 = vmatprep.subr.mxu0 %v109
    %557 = vmatpush1.msra.mxu0 %v108
    %558 = vmatprep.subr.mxu0 %v105
    %559 = vmatpush1.msra.mxu0 %v104
    %560 = vmatprep.subr.mxu0 %v101
    %561 = vmatpush1.msra.mxu0 %v100
    %562 = vmatprep.subr.mxu0 %v97
    %563 = vmatpush1.msra.mxu0 %v96
    %564 = vmatprep.subr.mxu0 %v93
    %565 = vmatpush1.msra.mxu0 %v92
    %566 = vmatprep.subr.mxu0 %v89
    %567 = vmatpush1.msra.mxu0 %v88
    %568 = vmatprep.subr.mxu0 %v85
    %569 = vmatpush1.msra.mxu0 %v84
    %570 = vmatprep.subr.mxu0 %v81
    %571 = vmatpush1.msra.mxu0 %v80
    %572 = vmatprep.subr.mxu0 %v77
    %573 = vmatpush1.msra.mxu0 %v76
    %574 = vmatprep.subr.mxu0 %v201
    %575 = vmatpush2.msra.mxu0 %v200
    %576 = vmatprep.subr.mxu0 %v197
    %577 = vmatpush2.msra.mxu0 %v196
    %578 = vmatprep.subr.mxu0 %v193
    %579 = vmatpush2.msra.mxu0 %v192
    %580 = vmatprep.subr.mxu0 %v189
    %581 = vmatpush2.msra.mxu0 %v188
    %582 = vmatprep.subr.mxu0 %v185
    %583 = vmatpush2.msra.mxu0 %v184
    %584 = vmatprep.subr.mxu0 %v181
    %585 = vmatpush2.msra.mxu0 %v180
    %586 = vmatprep.subr.mxu0 %v177
    %587 = vmatpush2.msra.mxu0 %v176
    %588 = vmatprep.subr.mxu0 %v173
    %589 = vmatpush2.msra.mxu0 %v172
    %590 = vmatprep.subr.mxu0 %v169
    %591 = vmatpush2.msra.mxu0 %v168
    %592 = vmatprep.subr.mxu0 %v165
    %593 = vmatpush2.msra.mxu0 %v164
    %594 = vmatprep.subr.mxu0 %v161
    %595 = vmatpush2.msra.mxu0 %v160
    %596 = vmatprep.subr.mxu0 %v157
    %597 = vmatpush2.msra.mxu0 %v156
    %598 = vmatprep.subr.mxu0 %v153
    %599 = vmatpush2.msra.mxu0 %v152
    %600 = vmatprep.subr.mxu0 %v149
    %601 = vmatpush2.msra.mxu0 %v148
    %602 = vmatprep.subr.mxu0 %v145
    %603 = vmatpush2.msra.mxu0 %v144
    %604 = vmatprep.subr.mxu0 %v141
    %605 = vmatpush2.msra.mxu0 %v140
    %606 = vmatprep.mubr.f32.mxu0 %v55
    %607 = vmatmul.mubr.f32.gmra.mxu0 %v54
    %v608 = vpop.f32.mrf.mxu0
    %v609 = vadd.f32 %v343, %v608
    %v610 = vpop.f32.mrf.mxu0
    %v611 = vadd.f32 %v347, %v610
    %612 = vmatprep.mubr.f32.mxu0 %v59
    %613 = vmatmul.mubr.f32.gmra.mxu0 %v58
    %v614 = vpop.f32.mrf.mxu0
    %v615 = vadd.f32 %v343, %v614
    %v616 = vpop.f32.mrf.mxu0
    %v617 = vadd.f32 %v347, %v616
    %618 = vmatprep.mubr.f32.mxu0 %v63
    %619 = vmatmul.mubr.f32.gmra.mxu0 %v62
    %v620 = vpop.f32.mrf.mxu0
    %v621 = vadd.f32 %v343, %v620
    %v622 = vpop.f32.mrf.mxu0
    %v623 = vadd.f32 %v347, %v622
    %624 = vmatprep.mubr.f32.mxu0 %v67
    %625 = vmatmul.mubr.f32.gmra.mxu0 %v66
    %v626 = vpop.f32.mrf.mxu0
    %v627 = vadd.f32 %v343, %v626
    %v628 = vpop.f32.mrf.mxu0
    %v629 = vadd.f32 %v347, %v628
    %630 = vmatprep.mubr.f32.mxu0 %v71
    %631 = vmatmul.mubr.f32.gmra.mxu0 %v70
    %v632 = vpop.f32.mrf.mxu0
    %v633 = vadd.f32 %v343, %v632
    %v634 = vpop.f32.mrf.mxu0
    %v635 = vadd.f32 %v347, %v634
    %636 = vdwg.mxu0
    %637 = vmatprep.subr.mxu0 %v265
    %638 = vmatpush1.msra.mxu0 %v264
    %639 = vmatprep.subr.mxu0 %v261
    %640 = vmatpush1.msra.mxu0 %v260
    %641 = vmatprep.subr.mxu0 %v257
    %642 = vmatpush1.msra.mxu0 %v256
    %643 = vmatprep.subr.mxu0 %v253
    %644 = vmatpush1.msra.mxu0 %v252
    %645 = vmatprep.subr.mxu0 %v249
    %646 = vmatpush1.msra.mxu0 %v248
    %647 = vmatprep.subr.mxu0 %v245
    %648 = vmatpush1.msra.mxu0 %v244
    %649 = vmatprep.subr.mxu0 %v241
    %650 = vmatpush1.msra.mxu0 %v240
    %651 = vmatprep.subr.mxu0 %v237
    %652 = vmatpush1.msra.mxu0 %v236
    %653 = vmatprep.subr.mxu0 %v233
    %654 = vmatpush1.msra.mxu0 %v232
    %655 = vmatprep.subr.mxu0 %v229
    %656 = vmatpush1.msra.mxu0 %v228
    %657 = vmatprep.subr.mxu0 %v225
    %658 = vmatpush1.msra.mxu0 %v224
    %659 = vmatprep.subr.mxu0 %v221
    %660 = vmatpush1.msra.mxu0 %v220
    %661 = vmatprep.subr.mxu0 %v217
    %662 = vmatpush1.msra.mxu0 %v216
    %663 = vmatprep.subr.mxu0 %v213
    %664 = vmatpush1.msra.mxu0 %v212
    %665 = vmatprep.subr.mxu0 %v209
    %666 = vmatpush1.msra.mxu0 %v208
    %667 = vmatprep.subr.mxu0 %v205
    %668 = vmatpush1.msra.mxu0 %v204
    %669 = vmatprep.subr.mxu0 %v329
    %670 = vmatpush2.msra.mxu0 %v328
    %671 = vmatprep.subr.mxu0 %v325
    %672 = vmatpush2.msra.mxu0 %v324
    %673 = vmatprep.subr.mxu0 %v321
    %674 = vmatpush2.msra.mxu0 %v320
    %675 = vmatprep.subr.mxu0 %v317
    %676 = vmatpush2.msra.mxu0 %v316
    %677 = vmatprep.subr.mxu0 %v313
    %678 = vmatpush2.msra.mxu0 %v312
    %679 = vmatprep.subr.mxu0 %v309
    %680 = vmatpush2.msra.mxu0 %v308
    %681 = vmatprep.subr.mxu0 %v305
    %682 = vmatpush2.msra.mxu0 %v304
    %683 = vmatprep.subr.mxu0 %v301
    %684 = vmatpush2.msra.mxu0 %v300
    %685 = vmatprep.subr.mxu0 %v297
    %686 = vmatpush2.msra.mxu0 %v296
    %687 = vmatprep.subr.mxu0 %v293
    %688 = vmatpush2.msra.mxu0 %v292
    %689 = vmatprep.subr.mxu0 %v289
    %690 = vmatpush2.msra.mxu0 %v288
    %691 = vmatprep.subr.mxu0 %v285
    %692 = vmatpush2.msra.mxu0 %v284
    %693 = vmatprep.subr.mxu0 %v281
    %694 = vmatpush2.msra.mxu0 %v280
    %695 = vmatprep.subr.mxu0 %v277
    %696 = vmatpush2.msra.mxu0 %v276
    %697 = vmatprep.subr.mxu0 %v273
    %698 = vmatpush2.msra.mxu0 %v272
    %699 = vmatprep.subr.mxu0 %v269
    %700 = vmatpush2.msra.mxu0 %v268
    %701 = vmatprep.mubr.f32.mxu0 %v57
    %702 = vmatmul.mubr.f32.gmra.mxu0 %v56
    %v703 = vpop.f32.mrf.mxu0
    %v704 = vadd.f32 %v609, %v703
    %v705 = vpop.f32.mrf.mxu0
    %v706 = vadd.f32 %v611, %v705
    %707 = vmatprep.mubr.f32.mxu0 %v61
    %708 = vmatmul.mubr.f32.gmra.mxu0 %v60
    %v709 = vpop.f32.mrf.mxu0
    %v710 = vadd.f32 %v615, %v709
    %v711 = vpop.f32.mrf.mxu0
    %v712 = vadd.f32 %v617, %v711
    %713 = vmatprep.mubr.f32.mxu0 %v65
    %714 = vmatmul.mubr.f32.gmra.mxu0 %v64
    %v715 = vpop.f32.mrf.mxu0
    %v716 = vadd.f32 %v621, %v715
    %v717 = vpop.f32.mrf.mxu0
    %v718 = vadd.f32 %v623, %v717
    %719 = vmatprep.mubr.f32.mxu0 %v69
    %720 = vmatmul.mubr.f32.gmra.mxu0 %v68
    %v721 = vpop.f32.mrf.mxu0
    %v722 = vadd.f32 %v627, %v721
    %v723 = vpop.f32.mrf.mxu0
    %v724 = vadd.f32 %v629, %v723
    %725 = vmatprep.mubr.f32.mxu0 %v73
    %726 = vmatmul.mubr.f32.gmra.mxu0 %v72
    %v727 = vpop.f32.mrf.mxu0
    %v728 = vadd.f32 %v633, %v727
    %v729 = vpop.f32.mrf.mxu0
    %v730 = vadd.f32 %v635, %v729
    %731 = vdwg.mxu0
    %732 = vst [vmem:[#allocation8] sm:$0xff] %v514
    %733 = vst [vmem:[#allocation8 + $0x8] sm:$0xff] %v516
    %734 = vst [vmem:[#allocation8 + $0x10] sm:$0xff] %v704
    %735 = vst [vmem:[#allocation8 + $0x18] sm:$0xff] %v706
    %736 = vst [vmem:[#allocation8 + $0x20] sm:$0xff] %v520
    %737 = vst [vmem:[#allocation8 + $0x28] sm:$0xff] %v522
    %738 = vst [vmem:[#allocation8 + $0x30] sm:$0xff] %v710
    %739 = vst [vmem:[#allocation8 + $0x38] sm:$0xff] %v712
    %740 = vst [vmem:[#allocation8 + $0x40] sm:$0xff] %v526
    %741 = vst [vmem:[#allocation8 + $0x48] sm:$0xff] %v528
    %742 = vst [vmem:[#allocation8 + $0x50] sm:$0xff] %v716
    %743 = vst [vmem:[#allocation8 + $0x58] sm:$0xff] %v718
    %744 = vst [vmem:[#allocation8 + $0x60] sm:$0xff] %v532
    %745 = vst [vmem:[#allocation8 + $0x68] sm:$0xff] %v534
    %746 = vst [vmem:[#allocation8 + $0x70] sm:$0xff] %v722
    %747 = vst [vmem:[#allocation8 + $0x78] sm:$0xff] %v724
    %748 = vst [vmem:[#allocation8 + $0x80] sm:$0xff] %v538
    %749 = vst [vmem:[#allocation8 + $0x88] sm:$0xff] %v540
    %750 = vst [vmem:[#allocation8 + $0x90] sm:$0xff] %v728
    %751 = vst [vmem:[#allocation8 + $0x98] sm:$0xff] %v730
    // Predicated region
    $region26: #{tpu_custom_call.1} parent=1 // pred_check
      _
    $region27: #{tpu_custom_call.1} parent=1 // pred_check_branch
      %753 = sbr.rel (0) target = $region29
    $region28: #{tpu_custom_call.1} parent=1 // pred_region
      %s755 = ssub.s32 2560, 2560
      %756 = vsyncadd [#allocation4], %s755
      %s757 = sshll.u32 [#allocation8], 4
      %s758 = int_to_ptr.vmem [resolvable:$true] %s757
      %763 = dma.vmem_to_hbm [thread:$0]  %s758, 2560, %s3, [#allocation4], 512, 512, 32
    $region29: #{tpu_custom_call.1} parent=1 // pred_fallthru
      _
    // Predicated region
    $region30: #{tpu_custom_call.1} parent=1 // pred_check
      _
    $region31: #{tpu_custom_call.1} parent=1 // pred_check_branch
      %765 = sbr.rel (0) target = $region33
    $region32: #{tpu_custom_call.1} parent=1 // pred_region
      %766 = dma.done [#allocation4], 2560
    $region33: #{tpu_custom_call.1} parent=1 // pred_fallthru
      _
    %767 = vsyncpa [#allocation3], 1
    %768 = vsyncpa [#allocation6], 1
    %769 = vsyncpa [#allocation4], 1

</llo_original>
